<compile_context>
chip_gen: v7x
topology: tpu7x:2x2x1
jax: 0.10.0
libtpu: 0.0.40
codegen_flags: <defaults>
</compile_context>

<pallas_src>
import jax
import jax.numpy as jnp
from jax.experimental import pallas as pl
from jax.experimental.pallas import tpu as pltpu


# ---------------------------------------------------------------------------
# Kernel 1: batched excite path on the pooled features.
#   gates = sigmoid( relu(pooled @ w1^T) @ w2^T )
# Tiny (B_pad x C) problem -> single un-gridded call, full-array blocks, f32.
# Weights are passed pre-transposed so no in-kernel (XLU) transpose is needed.
# ---------------------------------------------------------------------------
def _gate_kernel(pooled_ref, w1t_ref, w2t_ref, gate_ref):
    pooled = pooled_ref[...].astype(jnp.float32)                           # (Bp, C)
    h = jnp.dot(pooled, w1t_ref[...], preferred_element_type=jnp.float32)  # (Bp, Cr)
    h = jnp.maximum(h, 0.0)
    s = jnp.dot(h, w2t_ref[...], preferred_element_type=jnp.float32)       # (Bp, C)
    gate_ref[...] = jax.nn.sigmoid(s).astype(gate_ref.dtype)


# ---------------------------------------------------------------------------
# Kernel 2: streaming scale.  x tile (TR, TH) in native dtype, rows = (b, c)
# pairs, lanes = spatial.  Gate tile (TR, 1) broadcasts along lanes -> pure
# VPU multiply with lane-dense, unmasked stores.
# ---------------------------------------------------------------------------
def _scale_kernel(x_ref, gate_ref, o_ref):
    o_ref[...] = x_ref[...] * gate_ref[...]


def _device_tuning():
    """(target block bytes, vmem_limit_bytes) per TPU generation."""
    try:
        kind = jax.devices()[0].device_kind.lower()
    except Exception:  # pragma: no cover - defensive; default backend is TPU
        kind = ""
    if "v7" in kind:
        # 3.2 TB/s/TC HBM: ~8 MiB blocks; 2x double-buffered (in+out) + gate
        # fits comfortably in 48 MiB < 64 MiB physical VMEM per TC.
        return 8 << 20, 48 << 20
    if "v6" in kind:
        return 4 << 20, 32 << 20
    # v5e and unknown/older: 1-2 MiB blocks are already ~roofline; keep the
    # default scoped-VMEM limit.
    return 2 << 20, None


def _pick_tiles(rows, hw, dtype, target_bytes):
    """Pick (row_tile, lane_tile) for the (rows, hw) streaming scale.

    Row tile is a multiple of the dtype's native sublane packing (8 f32 /
    16 bf16 / 32 int8) or the full row extent; lane tile is a multiple of 128
    or the full hw extent, so stores stay unmasked."""
    itemsize = jnp.dtype(dtype).itemsize
    sub = 8 * max(1, 4 // itemsize)           # native sublane packing
    row_bytes = hw * itemsize
    row_budget = max(1, target_bytes // row_bytes)
    if row_budget >= rows:
        tr = rows                              # full extent: always legal
    else:
        tr = max(sub, (row_budget // sub) * sub)
        if tr > rows:
            tr = rows
    th = hw
    # Very large feature maps: even one sublane group of full-width rows blows
    # the budget -> tile the lane axis too (multiples of 128).
    if tr * row_bytes > 2 * target_bytes and hw > 128:
        tr = sub if rows > sub else rows
        th = max(128, ((target_bytes // (tr * itemsize)) // 128) * 128)
        if th > hw:
            th = hw
    return tr, th


def squeeze_and_excitation(x, w1, w2):
    """x: (B, C, H, W) NCHW (PyTorch layout). w1: (C//r, C), w2: (C, C//r)
    (PyTorch nn.Linear weight layout, no bias).
    Returns x * sigmoid(fc2(relu(fc1(global_avg_pool(x))))) with shape (B,C,H,W)."""
    B, C, H, W = x.shape
    Cr = w1.shape[0]
    HW = H * W
    rows = B * C
    itemsize = jnp.dtype(x.dtype).itemsize

    # ---- native layout: (B*C, H*W); contiguous reshape, no HBM transpose ---
    x2 = x.reshape(rows, HW)

    # ---- squeeze: global average pool = contiguous lane reduction (XLA) ----
    pooled = jnp.mean(x.reshape(B, C, HW), axis=-1, dtype=jnp.float32)     # (B, C)

    # ---- excite: fc1 -> relu -> fc2 -> sigmoid, one tiny Pallas call -------
    B_pad = ((B + 7) // 8) * 8                 # pad batch to a full sublane group
    pooled_p = jnp.pad(pooled, ((0, B_pad - B), (0, 0)))
    w1t = w1.T.astype(jnp.float32)             # (C, Cr)
    w2t = w2.T.astype(jnp.float32)             # (Cr, C)
    gate_cost = pl.CostEstimate(
        flops=2 * B_pad * (C * Cr + Cr * C),
        transcendentals=B_pad * C,
        bytes_accessed=(2 * B_pad * C + 2 * C * Cr) * 4,
    )
    gates = pl.pallas_call(
        _gate_kernel,
        out_shape=jax.ShapeDtypeStruct((B_pad, C), x.dtype),
        cost_estimate=gate_cost,
    )(pooled_p, w1t, w2t)                      # (B_pad, C) in x.dtype
    gates2 = gates[:B].reshape(rows, 1)        # per-(b, c) scalar gate

    # ---- scale: streaming x * gate over (row tiles, lane tiles) ------------
    target_bytes, vmem_limit = _device_tuning()
    tr, th = _pick_tiles(rows, HW, x.dtype, target_bytes)
    grid = (pl.cdiv(rows, tr), pl.cdiv(HW, th))
    scale_cost = pl.CostEstimate(
        flops=rows * HW,
        transcendentals=0,
        bytes_accessed=2 * rows * HW * itemsize + rows * itemsize,
    )

    out2 = pl.pallas_call(
        _scale_kernel,
        out_shape=jax.ShapeDtypeStruct((rows, HW), x.dtype),
        grid_spec=pltpu.PrefetchScalarGridSpec(
            num_scalar_prefetch=0,
            grid=grid,
            in_specs=[
                pl.BlockSpec((tr, th), lambda r, h: (r, h)),   # x rows tile
                pl.BlockSpec((tr, 1), lambda r, h: (r, 0)),    # per-row gate
            ],
            out_specs=pl.BlockSpec((tr, th), lambda r, h: (r, h)),
        ),
        compiler_params=pltpu.CompilerParams(
            dimension_semantics=("parallel", "parallel"),
            vmem_limit_bytes=vmem_limit,
        ),
        cost_estimate=scale_cost,
    )(x2, gates2)

    return out2.reshape(B, C, H, W)            # free, contiguous reshape


def _reference(x, w1, w2):
    # Pure-JAX reference matching the PyTorch SE forward exactly.
    y = jnp.mean(x, axis=(2, 3))                 # adaptive_avg_pool2d -> (B, C)
    y = jnp.maximum(y @ w1.T, 0.0)               # fc1 (no bias) + relu
    y = jax.nn.sigmoid(y @ w2.T)                 # fc2 (no bias) + sigmoid
    return x * y[:, :, None, None]


if __name__ == "__main__":
    key = jax.random.PRNGKey(0)
    kx, k1, k2 = jax.random.split(key, 3)

    B, C, H, W = 2, 4, 16, 16
    reduction = 4
    Cr = max(1, C // reduction)

    x = jax.random.normal(kx, (B, C, H, W), dtype=jnp.float32)
    # Deterministic synthetic weights (PyTorch nn.Linear weight shapes: (out, in)).
    w1 = jax.random.normal(k1, (Cr, C), dtype=jnp.float32) * 0.5
    w2 = jax.random.normal(k2, (C, Cr), dtype=jnp.float32) * 0.5

    out = squeeze_and_excitation(x, w1, w2)
    out = jax.block_until_ready(out)

    ref = _reference(x, w1, w2)
    assert out.shape == (B, C, H, W)
    assert jnp.allclose(out, ref, atol=1e-5, rtol=1e-5), "mismatch vs reference"

    print("KERNEL_OK")
</pallas_src>

<mosaic_0001>
module attributes {stable_mosaic.version = 11 : i64} {
  func.func @_gate_kernel(%arg0: memref<8x4xf32, #tpu.memory_space<vmem>>, %arg1: memref<4x1xf32, #tpu.memory_space<vmem>>, %arg2: memref<1x4xf32, #tpu.memory_space<vmem>>, %arg3: memref<8x4xf32, #tpu.memory_space<vmem>>) attributes {dimension_semantics = [], scalar_prefetch = 0 : i64, scratch_operands = 0 : i64, tpu.core_type = #tpu.core_type<tc>} {
    %c0 = arith.constant 0 : index
    %c0_0 = arith.constant 0 : index
    %0 = vector.load %arg0[%c0, %c0_0] : memref<8x4xf32, #tpu.memory_space<vmem>>, vector<8x4xf32>
    %c0_1 = arith.constant 0 : index
    %c0_2 = arith.constant 0 : index
    %1 = vector.load %arg1[%c0_1, %c0_2] : memref<4x1xf32, #tpu.memory_space<vmem>>, vector<4x1xf32>
    %cst = arith.constant dense<0.000000e+00> : vector<8x1xf32>
    %2 = tpu.matmul %0, %1, %cst {dimension_numbers = #tpu.dot_dimension_numbers<[1], [0], [0], [1], [0, 0, 1, 1], [], []>} : vector<8x4xf32>, vector<4x1xf32>, vector<8x1xf32> -> vector<8x1xf32>
    %cst_3 = arith.constant 0.000000e+00 : f32
    %3 = vector.broadcast %cst_3 : f32 to vector<8x1xf32>
    %4 = arith.maximumf %2, %3 : vector<8x1xf32>
    %c0_4 = arith.constant 0 : index
    %c0_5 = arith.constant 0 : index
    %5 = vector.load %arg2[%c0_4, %c0_5] : memref<1x4xf32, #tpu.memory_space<vmem>>, vector<1x4xf32>
    %cst_6 = arith.constant dense<0.000000e+00> : vector<8x4xf32>
    %6 = tpu.matmul %4, %5, %cst_6 {dimension_numbers = #tpu.dot_dimension_numbers<[1], [0], [0], [1], [0, 0, 1, 1], [], []>} : vector<8x1xf32>, vector<1x4xf32>, vector<8x4xf32> -> vector<8x4xf32>
    %7 = arith.negf %6 : vector<8x4xf32>
    %8 = math.exp %7 : vector<8x4xf32>
    %cst_7 = arith.constant 1.000000e+00 : f32
    %9 = vector.broadcast %cst_7 : f32 to vector<8x4xf32>
    %10 = arith.addf %9, %8 : vector<8x4xf32>
    %11 = arith.divf %9, %10 : vector<8x4xf32>
    %c0_8 = arith.constant 0 : index
    %c0_9 = arith.constant 0 : index
    %12 = vector.load %arg3[%c0_8, %c0_9] : memref<8x4xf32, #tpu.memory_space<vmem>>, vector<8x4xf32>
    tpu.vector_store %arg3[%c0_8, %c0_9], %11 {strides = array<i32>} : memref<8x4xf32, #tpu.memory_space<vmem>>, vector<8x4xf32>,
    return
  }
}

</mosaic_0001>

<llo_original>
// kernel: tpu_custom_call.1
$region0: #{tpu_custom_call.1}
  #allocation0 [shape = 'u32[]', space=smem, size = 0x4, offset = 0x4, fixed_abs, tag = 'smem constant byte address 0x4 - core index']
  #allocation1 [shape = 'u32[144,128]{1,0:T(1,128)}', space=vmem, size = 0x12000, scoped, tag = 'internal scratch']
  %s0 = inlined_call_operand.vmem [shape: f32[8,4], index: 0, kind: input, shape index: {}]
  %s1 = inlined_call_operand.vmem [shape: f32[4,1], index: 1, kind: input, shape index: {}]
  %s2 = inlined_call_operand.vmem [shape: f32[1,4], index: 2, kind: input, shape index: {}]
  %s3 = inlined_call_operand.vmem [shape: f32[8,4], index: 3, kind: output, shape index: {}]
  %s4 = sld [smem:[#allocation0]]
  $region22: #{tpu_custom_call.1} parent=0
    _
  %s6 = ssub.s32 1, %s4
  %s7 = scalar_select 0, %s6, %s4
  // Predicated region
  $region2: #{tpu_custom_call.1} parent=0 // pred_check
    _
  $region3: #{tpu_custom_call.1} parent=0 // pred_check_branch
    %9 = sbr.rel (0) target = $region5
  $region4: #{tpu_custom_call.1} parent=0 // pred_region
    _
  $region5: #{tpu_custom_call.1} parent=0 // pred_fallthru
    _
  // Predicated region
  $region6: #{tpu_custom_call.1} parent=0 // pred_check
    _
  $region7: #{tpu_custom_call.1} parent=0 // pred_check_branch
    %11 = sbr.rel (0) target = $region9
  $region8: #{tpu_custom_call.1} parent=0 // pred_region
    _
  $region9: #{tpu_custom_call.1} parent=0 // pred_fallthru
    _
  // Predicated region
  $region10: #{tpu_custom_call.1} parent=0 // pred_check
    _
  $region11: #{tpu_custom_call.1} parent=0 // pred_check_branch
    %13 = sbr.rel (0) target = $region13
  $region12: #{tpu_custom_call.1} parent=0 // pred_region
    _
  $region13: #{tpu_custom_call.1} parent=0 // pred_fallthru
    _
  %v14 = vld [vmem:[%s0] sm:$0xff]
  %v15 = vld [vmem:[%s1] sm:$0xf]
  %vm16 = vcmask 31744
  %v18 = vsel %vm16, %v14, 0
  %vm20 = vcmask 1043456
  %v22 = vsel %vm20, %v15, 0
  %24 = vmatprep.subr.mxu0 0.0
  %25 = vmatpush1.msra.mxu0 %v22
  %26 = vmatprep.subr.mxu0 0.0
  %27 = vmatpush1.msra.mxu0 0.0
  %28 = vmatprep.subr.mxu0 0.0
  %29 = vmatpush1.msra.mxu0 0.0
  %30 = vmatprep.subr.mxu0 0.0
  %31 = vmatpush1.msra.mxu0 0.0
  %32 = vmatprep.subr.mxu0 0.0
  %33 = vmatpush1.msra.mxu0 0.0
  %34 = vmatprep.subr.mxu0 0.0
  %35 = vmatpush1.msra.mxu0 0.0
  %36 = vmatprep.subr.mxu0 0.0
  %37 = vmatpush1.msra.mxu0 0.0
  %38 = vmatprep.subr.mxu0 0.0
  %39 = vmatpush1.msra.mxu0 0.0
  %40 = vmatprep.subr.mxu0 0.0
  %41 = vmatpush1.msra.mxu0 0.0
  %42 = vmatprep.subr.mxu0 0.0
  %43 = vmatpush1.msra.mxu0 0.0
  %44 = vmatprep.subr.mxu0 0.0
  %45 = vmatpush1.msra.mxu0 0.0
  %46 = vmatprep.subr.mxu0 0.0
  %47 = vmatpush1.msra.mxu0 0.0
  %48 = vmatprep.subr.mxu0 0.0
  %49 = vmatpush1.msra.mxu0 0.0
  %50 = vmatprep.subr.mxu0 0.0
  %51 = vmatpush1.msra.mxu0 0.0
  %52 = vmatprep.subr.mxu0 0.0
  %53 = vmatpush1.msra.mxu0 0.0
  %54 = vmatprep.subr.mxu0 0.0
  %55 = vmatpush1.msra.mxu0 0.0
  %56 = vmatprep.subr.mxu0 0.0
  %57 = vmatpush1.msra.mxu0 0.0
  %58 = vmatprep.subr.mxu0 0.0
  %59 = vmatpush1.msra.mxu0 0.0
  %60 = vmatprep.subr.mxu0 0.0
  %61 = vmatpush1.msra.mxu0 0.0
  %62 = vmatprep.subr.mxu0 0.0
  %63 = vmatpush1.msra.mxu0 0.0
  %64 = vmatprep.subr.mxu0 0.0
  %65 = vmatpush1.msra.mxu0 0.0
  %66 = vmatprep.subr.mxu0 0.0
  %67 = vmatpush1.msra.mxu0 0.0
  %68 = vmatprep.subr.mxu0 0.0
  %69 = vmatpush1.msra.mxu0 0.0
  %70 = vmatprep.subr.mxu0 0.0
  %71 = vmatpush1.msra.mxu0 0.0
  %72 = vmatprep.subr.mxu0 0.0
  %73 = vmatpush1.msra.mxu0 0.0
  %74 = vmatprep.subr.mxu0 0.0
  %75 = vmatpush1.msra.mxu0 0.0
  %76 = vmatprep.subr.mxu0 0.0
  %77 = vmatpush1.msra.mxu0 0.0
  %78 = vmatprep.subr.mxu0 0.0
  %79 = vmatpush1.msra.mxu0 0.0
  %80 = vmatprep.subr.mxu0 0.0
  %81 = vmatpush1.msra.mxu0 0.0
  %82 = vmatprep.subr.mxu0 0.0
  %83 = vmatpush1.msra.mxu0 0.0
  %84 = vmatprep.subr.mxu0 0.0
  %85 = vmatpush1.msra.mxu0 0.0
  %86 = vmatprep.subr.mxu0 0.0
  %87 = vmatpush1.msra.mxu0 0.0
  %88 = vmatprep.mubr.f32.mxu0 0.0
  %89 = vmatmul.mubr.f32.gmra.mrb[0].mxu0 %v18
  %v90 = vpop.f32.mrb[0].mxu0
  %v91 = vadd.f32 0.0, %v90
  %v92 = vpop.f32.mrb[0].mxu0
  %93 = vdwg.mxu0
  %v94 = vmax.f32 %v91, 0.0
  %v95 = vld [vmem:[%s2] sm:$0x1]
  %vm96 = vcmask 7168
  %v98 = vsel %vm96, %v94, 0
  %vm100 = vcmask 1040384
  %v102 = vsel %vm100, %v95, 0
  %104 = vmatprep.subr.mxu0 0.0
  %105 = vmatpush1.msra.mxu0 %v102
  %106 = vmatprep.subr.mxu0 0.0
  %107 = vmatpush1.msra.mxu0 0.0
  %108 = vmatprep.subr.mxu0 0.0
  %109 = vmatpush1.msra.mxu0 0.0
  %110 = vmatprep.subr.mxu0 0.0
  %111 = vmatpush1.msra.mxu0 0.0
  %112 = vmatprep.subr.mxu0 0.0
  %113 = vmatpush1.msra.mxu0 0.0
  %114 = vmatprep.subr.mxu0 0.0
  %115 = vmatpush1.msra.mxu0 0.0
  %116 = vmatprep.subr.mxu0 0.0
  %117 = vmatpush1.msra.mxu0 0.0
  %118 = vmatprep.subr.mxu0 0.0
  %119 = vmatpush1.msra.mxu0 0.0
  %120 = vmatprep.subr.mxu0 0.0
  %121 = vmatpush1.msra.mxu0 0.0
  %122 = vmatprep.subr.mxu0 0.0
  %123 = vmatpush1.msra.mxu0 0.0
  %124 = vmatprep.subr.mxu0 0.0
  %125 = vmatpush1.msra.mxu0 0.0
  %126 = vmatprep.subr.mxu0 0.0
  %127 = vmatpush1.msra.mxu0 0.0
  %128 = vmatprep.subr.mxu0 0.0
  %129 = vmatpush1.msra.mxu0 0.0
  %130 = vmatprep.subr.mxu0 0.0
  %131 = vmatpush1.msra.mxu0 0.0
  %132 = vmatprep.subr.mxu0 0.0
  %133 = vmatpush1.msra.mxu0 0.0
  %134 = vmatprep.subr.mxu0 0.0
  %135 = vmatpush1.msra.mxu0 0.0
  %136 = vmatprep.subr.mxu0 0.0
  %137 = vmatpush1.msra.mxu0 0.0
  %138 = vmatprep.subr.mxu0 0.0
  %139 = vmatpush1.msra.mxu0 0.0
  %140 = vmatprep.subr.mxu0 0.0
  %141 = vmatpush1.msra.mxu0 0.0
  %142 = vmatprep.subr.mxu0 0.0
  %143 = vmatpush1.msra.mxu0 0.0
  %144 = vmatprep.subr.mxu0 0.0
  %145 = vmatpush1.msra.mxu0 0.0
  %146 = vmatprep.subr.mxu0 0.0
  %147 = vmatpush1.msra.mxu0 0.0
  %148 = vmatprep.subr.mxu0 0.0
  %149 = vmatpush1.msra.mxu0 0.0
  %150 = vmatprep.subr.mxu0 0.0
  %151 = vmatpush1.msra.mxu0 0.0
  %152 = vmatprep.subr.mxu0 0.0
  %153 = vmatpush1.msra.mxu0 0.0
  %154 = vmatprep.subr.mxu0 0.0
  %155 = vmatpush1.msra.mxu0 0.0
  %156 = vmatprep.subr.mxu0 0.0
  %157 = vmatpush1.msra.mxu0 0.0
  %158 = vmatprep.subr.mxu0 0.0
  %159 = vmatpush1.msra.mxu0 0.0
  %160 = vmatprep.subr.mxu0 0.0
  %161 = vmatpush1.msra.mxu0 0.0
  %162 = vmatprep.subr.mxu0 0.0
  %163 = vmatpush1.msra.mxu0 0.0
  %164 = vmatprep.subr.mxu0 0.0
  %165 = vmatpush1.msra.mxu0 0.0
  %166 = vmatprep.subr.mxu0 0.0
  %167 = vmatpush1.msra.mxu0 0.0
  %168 = vmatprep.mubr.f32.mxu0 0.0
  %169 = vmatmul.mubr.f32.gmra.mrb[0].mxu0 %v98
  %v170 = vpop.f32.mrb[0].mxu0
  %v171 = vadd.f32 0.0, %v170
  %v172 = vpop.f32.mrb[0].mxu0
  %173 = vdwg.mxu0
  %v174 = vxor.u32 %v171, 2147483648
  %v175 = vmul.f32 %v174, 1.442695
  %v176 = vpow.pop %v175
  %v177 = vadd.f32 %v176, 1.0
  %v178 = vrcp.pop %v177
  %v179 = vmul.f32 1.0, %v178
  %180 = vst.msk [vmem:[%s3] sm:$0xff] %vm16, %v179
  // Predicated region
  $region14: #{tpu_custom_call.1} parent=0 // pred_check
    _
  $region15: #{tpu_custom_call.1} parent=0 // pred_check_branch
    %182 = sbr.rel (0) target = $region17
  $region16: #{tpu_custom_call.1} parent=0 // pred_region
    _
  $region17: #{tpu_custom_call.1} parent=0 // pred_fallthru
    _
  // Predicated region
  $region18: #{tpu_custom_call.1} parent=0 // pred_check
    _
  $region19: #{tpu_custom_call.1} parent=0 // pred_check_branch
    %184 = sbr.rel (0) target = $region21
  $region20: #{tpu_custom_call.1} parent=0 // pred_region
    _
  $region21: #{tpu_custom_call.1} parent=0 // pred_fallthru
    _

</llo_original>
